<compile_context>
chip_gen: v6e
topology: v6e:2x2x1
jax: 0.10.0
libtpu: 0.0.40
codegen_flags: <defaults>
</compile_context>

<pallas_src>
import numpy as np
import jax
import jax.numpy as jnp
from jax.experimental import pallas as pl
from jax.experimental.pallas import tpu as pltpu

# ---------------- configuration (small, consistent with the module) ----------------
IN_CHANNELS = 4             # history length (Conv1d channels)
NUM_PROPRIO = 16            # per-step proprio obs dim (Conv1d sequence length)
NUM_OBS = IN_CHANNELS * NUM_PROPRIO          # 64 total observation dim
NUM_SHORT = 16              # num_short_obs (last slice of observations)

SE_HIDDEN = 32
SE_OUT = 3                  # estimated base velocity

CONV_OUT_CH = 8
CONV_K = 4
CONV_STRIDE = 2
CONV_T = (NUM_PROPRIO - CONV_K) // CONV_STRIDE + 1   # 7 output timesteps
PATCH = IN_CHANNELS * CONV_K                          # 16 elements per im2col patch
LH_FLAT = CONV_OUT_CH * CONV_T                        # 56
LH_LATENT = 16

ACTOR_IN = NUM_SHORT + SE_OUT + LH_LATENT             # 35
ACTOR_HIDDEN = 32
NUM_ACTIONS = 12

# ---------------- single weight-slab layout (bf16, lane-dense, 256 lanes) ----------------
# Row blocks start on multiples of 16 (bf16 sublane tile) so in-kernel views are aligned.
SLAB_COLS = 256
R_W1, R_B1 = 0, 64          # W1 (64, 256)   | b1 row
R_W2, R_B2 = 80, 208        # W2 (128, 256)  | b2 row
R_A1C = 224                 # wa1_c padded to (128, 128) in cols 0:128
R_A2W, R_A2B = 352, 480     # wa2 (128, 128) | ba2 row
R_A3W, R_A3B = 496, 624     # wa3 (128, 128) | ba3 row
SLAB_ROWS = 640             # ~320 KB bf16 -> trivially VMEM-resident on v5e/v6e/v7x


def _elu(x):
    # ELU(alpha=1) in f32; clamp exp argument so the discarded branch stays finite.
    return jnp.where(x > 0, x, jnp.exp(jnp.minimum(x, 0.0)) - 1.0)


# ------------------------------- Pallas kernel --------------------------------------
def dh_kernel(obs_ref, slab_ref, out_ref):
    bf16, f32 = jnp.bfloat16, jnp.float32
    obs = obs_ref[...].astype(bf16)                                   # (TB, 64)

    # Stage 1 (one K=64 matmul): lanes 0:32  = state-estimator hidden pre-act,
    #                            lanes 32:88 = conv timesteps (im2col + block-diag folded),
    #                            lanes 128:160 = actor-layer-1 short-obs partial (NO ELU).
    w1 = slab_ref[R_W1:R_W1 + NUM_OBS, :]                             # (64, 256) bf16
    b1 = slab_ref[R_B1:R_B1 + 1, :].astype(f32)                       # (1, 256)
    z1 = jnp.dot(obs, w1, preferred_element_type=f32) + b1            # (TB, 256) f32
    y1 = _elu(z1[:, :128]).astype(bf16)                               # (TB, 128) [h | conv | 0-pad]
    a1_obs = z1[:, 128:]                                              # (TB, 128) actor-1 obs part

    # Stage 2 (one K=128 matmul over y1): lanes 0:32  = es_vel-folded actor-1 partial (+ a_b1),
    #                                     lanes 128:144 = long-history compressor pre-act.
    w2 = slab_ref[R_W2:R_W2 + 128, :]                                 # (128, 256) bf16
    b2 = slab_ref[R_B2:R_B2 + 1, :].astype(f32)
    z2 = jnp.dot(y1, w2, preferred_element_type=f32) + b2             # (TB, 256) f32
    comp = _elu(z2[:, 128:]).astype(bf16)                             # (TB, 128) [comp | 0-pad]
    a1_vel = z2[:, :128]                                              # actor-1 es_vel part + bias

    # Actor layer 1: obs partial + es_vel partial + comp contribution (all tile-aligned).
    wa1c = slab_ref[R_A1C:R_A1C + 128, :128]                          # (128, 128) bf16 (0-padded)
    a1 = _elu(a1_obs + a1_vel +
              jnp.dot(comp, wa1c, preferred_element_type=f32)).astype(bf16)   # (TB, 128)

    wa2 = slab_ref[R_A2W:R_A2W + 128, :128]
    ba2 = slab_ref[R_A2B:R_A2B + 1, :128].astype(f32)
    a2 = _elu(jnp.dot(a1, wa2, preferred_element_type=f32) + ba2).astype(bf16)

    wa3 = slab_ref[R_A3W:R_A3W + 128, :128]
    ba3 = slab_ref[R_A3B:R_A3B + 1, :128].astype(f32)
    out = jnp.dot(a2, wa3, preferred_element_type=f32) + ba3          # (TB, 128)
    out_ref[...] = out[:, :NUM_ACTIONS]                               # single masked 12-lane store


# --------------------------- one-time parameter packing ------------------------------
def _build_selection_matrix():
    """S (64, 128): obs @ S == [short(16) | im2col patches(7*16)] (static 0/1 duplication)."""
    src = []
    for n in range(NUM_SHORT):                       # short_history = obs[:, -16:]
        src.append(NUM_OBS - NUM_SHORT + n)
    for t in range(CONV_T):                          # patch (t): x3d[:, c, t*stride + k]
        for c in range(IN_CHANNELS):
            for k in range(CONV_K):
                src.append(c * NUM_PROPRIO + t * CONV_STRIDE + k)
    src = np.asarray(src, dtype=np.int64)
    S = np.zeros((NUM_OBS, src.size), dtype=np.float32)
    S[src, np.arange(src.size)] = 1.0
    return S


def pack_params(params):
    """Export/load-time repacking of PyTorch-layout params into ONE bf16 weight slab."""
    p = {k: np.asarray(v, dtype=np.float32) for k, v in params.items()}
    S = _build_selection_matrix()                                     # (64, 128)

    # Conv weight (C_out, C_in, K) -> (C_in*K, C_out) matmul form, row index = c*K + k.
    wc = p["conv_w"].reshape(CONV_OUT_CH, PATCH).T                    # (16, 8)

    # Stage-1 weight in [short|patches] space, 256 output lanes, then folded through S.
    w1_pack = np.zeros((NUM_SHORT + CONV_T * PATCH, SLAB_COLS), np.float32)    # (128, 256)
    w1_pack[:NUM_SHORT, :SE_HIDDEN] = p["se_w1"]
    for t in range(CONV_T):                                           # block-diagonal conv
        r0 = NUM_SHORT + t * PATCH
        c0 = SE_HIDDEN + t * CONV_OUT_CH
        w1_pack[r0:r0 + PATCH, c0:c0 + CONV_OUT_CH] = wc
    # Actor-layer-1 short-obs contribution goes to lanes 128:160 (used WITHOUT activation).
    w1_pack[:NUM_SHORT, 128:128 + ACTOR_HIDDEN] = p["a_w1"][:NUM_SHORT]
    w1 = S @ w1_pack                                                  # (64, 256)

    b1 = np.zeros((1, SLAB_COLS), np.float32)
    b1[0, :SE_HIDDEN] = p["se_b1"][0]
    b1[0, SE_HIDDEN:SE_HIDDEN + LH_FLAT] = np.tile(p["conv_b"][0], CONV_T)   # col = 32 + t*8 + c

    # Permute lh_w rows so kernel's time-major conv columns (i = t*C + c) match
    # PyTorch's channel-major nn.Flatten rows (j = c*T + t).
    i = np.arange(LH_FLAT)
    perm = (i % CONV_OUT_CH) * CONV_T + (i // CONV_OUT_CH)
    wlh_perm = p["lh_w"][perm]                                        # (56, 16)

    # Fold the linear es_vel layer into actor layer 1: es_vel @ wa1_v = h @ (se_w2 @ wa1_v).
    wa1 = p["a_w1"]                                                   # (35, 32)
    wa1_v = wa1[NUM_SHORT:NUM_SHORT + SE_OUT]                         # (3, 32)
    wa1_c = wa1[NUM_SHORT + SE_OUT:]                                  # (16, 32)

    # Stage-2 weight over y1 = [h(32) | conv_flat(56) | pad]:
    #   lanes 0:32    <- h @ (se_w2 @ wa1_v)      (es_vel contribution to actor layer 1)
    #   lanes 128:144 <- conv_flat @ wlh_perm     (comp pre-activation)
    w2 = np.zeros((128, SLAB_COLS), np.float32)
    w2[:SE_HIDDEN, :ACTOR_HIDDEN] = p["se_w2"] @ wa1_v
    w2[SE_HIDDEN:SE_HIDDEN + LH_FLAT, 128:128 + LH_LATENT] = wlh_perm

    b2 = np.zeros((1, SLAB_COLS), np.float32)
    b2[0, :ACTOR_HIDDEN] = (p["a_b1"] + p["se_b2"] @ wa1_v)[0]        # actor-1 bias added once here
    b2[0, 128:128 + LH_LATENT] = p["lh_b"][0]

    # Assemble the single lane-dense slab (zero padding everywhere else).
    slab = np.zeros((SLAB_ROWS, SLAB_COLS), np.float32)
    slab[R_W1:R_W1 + NUM_OBS] = w1
    slab[R_B1] = b1[0]
    slab[R_W2:R_W2 + 128] = w2
    slab[R_B2] = b2[0]
    slab[R_A1C:R_A1C + LH_LATENT, :ACTOR_HIDDEN] = wa1_c
    slab[R_A2W:R_A2W + ACTOR_HIDDEN, :ACTOR_HIDDEN] = p["a_w2"]
    slab[R_A2B, :ACTOR_HIDDEN] = p["a_b2"][0]
    slab[R_A3W:R_A3W + ACTOR_HIDDEN, :NUM_ACTIONS] = p["a_w3"]
    slab[R_A3B, :NUM_ACTIONS] = p["a_b3"][0]
    return jnp.asarray(slab, dtype=jnp.bfloat16)


# ------------------------------- wrapper (dispatch path) -----------------------------
def _round_up(x, m):
    return ((x + m - 1) // m) * m


def exported_dh_forward(observations, slab):
    Bn, D = observations.shape
    assert D == NUM_OBS, observations.shape
    obs = observations.astype(jnp.float32)

    # Batch tiling: rows per grid step are a multiple of 8 (f32 sublane), capped at 128.
    TB = min(_round_up(Bn, 8), 128)
    Bp = _round_up(Bn, TB)
    if Bp != Bn:
        obs = jnp.pad(obs, ((0, Bp - Bn), (0, 0)))

    out = pl.pallas_call(
        dh_kernel,
        out_shape=jax.ShapeDtypeStruct((Bp, NUM_ACTIONS), jnp.float32),
        grid_spec=pltpu.PrefetchScalarGridSpec(
            num_scalar_prefetch=0,
            grid=(Bp // TB,),
            in_specs=[
                pl.BlockSpec((TB, NUM_OBS), lambda i: (i, 0)),        # obs batch tile
                pl.BlockSpec((SLAB_ROWS, SLAB_COLS), lambda i: (0, 0)),  # resident weight slab
            ],
            out_specs=pl.BlockSpec((TB, NUM_ACTIONS), lambda i: (i, 0)),
        ),
        compiler_params=pltpu.CompilerParams(
            dimension_semantics=("parallel",)),                       # v7x: split batch over 2 TCs
    )(obs, slab)
    return out[:Bn] if Bp != Bn else out


# ----------------------------- pure-JAX f32 reference ---------------------------------
def reference_forward(observations, params):
    obs = observations.astype(jnp.float32)
    Bn = obs.shape[0]
    short = obs[:, -NUM_SHORT:]
    h = _elu(short @ params["se_w1"] + params["se_b1"])
    es_vel = h @ params["se_w2"] + params["se_b2"]

    x3d = obs.reshape(Bn, IN_CHANNELS, NUM_PROPRIO)
    conv_cols = []
    for t in range(CONV_T):
        win = x3d[:, :, t * CONV_STRIDE: t * CONV_STRIDE + CONV_K]        # (B, C_in, K)
        conv_cols.append(jnp.einsum("bik,oik->bo", win, params["conv_w"]) + params["conv_b"])
    conv_out = _elu(jnp.stack(conv_cols, axis=-1))                        # (B, C_out, T)
    flat = conv_out.reshape(Bn, LH_FLAT)                                  # channel-major (torch Flatten)
    comp = _elu(flat @ params["lh_w"] + params["lh_b"])

    actor_obs = jnp.concatenate([short, es_vel, comp], axis=-1)
    a = _elu(actor_obs @ params["a_w1"] + params["a_b1"])
    a = _elu(a @ params["a_w2"] + params["a_b2"])
    return a @ params["a_w3"] + params["a_b3"]


# ------------------------------- param init ------------------------------------------
def init_params(key):
    ks = jax.random.split(key, 16)
    n = lambda k, shape: (0.1 * jax.random.normal(k, shape)).astype(jnp.float32)
    return {
        "se_w1": n(ks[0], (NUM_SHORT, SE_HIDDEN)),  "se_b1": n(ks[1], (1, SE_HIDDEN)),
        "se_w2": n(ks[2], (SE_HIDDEN, SE_OUT)),     "se_b2": n(ks[3], (1, SE_OUT)),
        "conv_w": n(ks[4], (CONV_OUT_CH, IN_CHANNELS, CONV_K)),
        "conv_b": n(ks[5], (1, CONV_OUT_CH)),
        "lh_w": n(ks[6], (LH_FLAT, LH_LATENT)),     "lh_b": n(ks[7], (1, LH_LATENT)),
        "a_w1": n(ks[8], (ACTOR_IN, ACTOR_HIDDEN)), "a_b1": n(ks[9], (1, ACTOR_HIDDEN)),
        "a_w2": n(ks[10], (ACTOR_HIDDEN, ACTOR_HIDDEN)), "a_b2": n(ks[11], (1, ACTOR_HIDDEN)),
        "a_w3": n(ks[12], (ACTOR_HIDDEN, NUM_ACTIONS)),  "a_b3": n(ks[13], (1, NUM_ACTIONS)),
    }


if __name__ == "__main__":
    key = jax.random.PRNGKey(0)
    k_obs, k_par = jax.random.split(key)
    B = 16                                     # small demo batch (wrapper handles any B)
    observations = jax.random.normal(k_obs, (B, NUM_OBS), dtype=jnp.float32)
    params = init_params(k_par)

    # One-time weight packing (export/load time), off the per-call dispatch path.
    slab = jax.block_until_ready(pack_params(params))

    actions = jax.block_until_ready(exported_dh_forward(observations, slab))
    ref = jax.block_until_ready(reference_forward(observations, params))

    assert actions.shape == (B, NUM_ACTIONS)
    max_err = float(jnp.max(jnp.abs(actions - ref)))
    # bf16 matmul operands (f32 accumulation) -> validate against the f32 reference with a
    # correspondingly looser tolerance, as flagged in the perf review.
    assert jnp.allclose(actions, ref, atol=3e-2, rtol=3e-2), f"mismatch vs reference (max|err|={max_err})"
    print("KERNEL_OK")
</pallas_src>

<mosaic_0001>
module attributes {stable_mosaic.version = 11 : i64} {
  func.func @dh_kernel(%arg0: i32, %arg1: memref<16x64xf32, #tpu.memory_space<vmem>>, %arg2: memref<640x256xbf16, #tpu.memory_space<vmem>>, %arg3: memref<16x12xf32, #tpu.memory_space<vmem>>) attributes {dimension_semantics = [#tpu.dimension_semantics<parallel>], iteration_bounds = array<i64: 1>, scalar_prefetch = 0 : i64, scratch_operands = 0 : i64, tpu.core_type = #tpu.core_type<tc>, window_params = [{transform_indices = @transform_0, window_bounds = array<i64: 16, 64>}, {pipeline_mode = #tpu.pipeline_mode<synchronous>, transform_indices = @transform_1, window_bounds = array<i64: 640, 256>}, {transform_indices = @transform_2, window_bounds = array<i64: 16, 12>}]} {
    %c0 = arith.constant 0 : index
    %c0_0 = arith.constant 0 : index
    %0 = vector.load %arg1[%c0, %c0_0] : memref<16x64xf32, #tpu.memory_space<vmem>>, vector<16x64xf32>
    %1 = arith.truncf %0 : vector<16x64xf32> to vector<16x64xbf16>
    %c0_1 = arith.constant 0 : index
    %c0_2 = arith.constant 0 : index
    %2 = vector.load %arg2[%c0_1, %c0_2] : memref<640x256xbf16, #tpu.memory_space<vmem>>, vector<64x256xbf16>
    %c64 = arith.constant 64 : index
    %c0_3 = arith.constant 0 : index
    %3 = vector.load %arg2[%c64, %c0_3] : memref<640x256xbf16, #tpu.memory_space<vmem>>, vector<1x256xbf16>
    %4 = arith.extf %3 : vector<1x256xbf16> to vector<1x256xf32>
    %cst = arith.constant dense<0.000000e+00> : vector<16x256xf32>
    %5 = tpu.matmul %1, %2, %cst {dimension_numbers = #tpu.dot_dimension_numbers<[1], [0], [0], [1], [0, 0, 1, 1], [], []>} : vector<16x64xbf16>, vector<64x256xbf16>, vector<16x256xf32> -> vector<16x256xf32>
    %6 = vector.broadcast %4 : vector<1x256xf32> to vector<16x256xf32>
    %7 = arith.addf %5, %6 : vector<16x256xf32>
    %8 = vector.extract_strided_slice %7 {offsets = [0, 0], sizes = [16, 128], strides = [1, 1]} : vector<16x256xf32> to vector<16x128xf32>
    %cst_4 = arith.constant 0.000000e+00 : f32
    %9 = vector.broadcast %cst_4 : f32 to vector<16x128xf32>
    %10 = arith.cmpf ogt, %8, %9 : vector<16x128xf32>
    %cst_5 = arith.constant 0.000000e+00 : f32
    %11 = vector.broadcast %cst_5 : f32 to vector<16x128xf32>
    %12 = arith.minimumf %8, %11 : vector<16x128xf32>
    %13 = math.exp %12 : vector<16x128xf32>
    %cst_6 = arith.constant 1.000000e+00 : f32
    %14 = vector.broadcast %cst_6 : f32 to vector<16x128xf32>
    %15 = arith.subf %13, %14 : vector<16x128xf32>
    %16 = arith.select %10, %8, %15 : vector<16x128xi1>, vector<16x128xf32>
    %17 = arith.truncf %16 : vector<16x128xf32> to vector<16x128xbf16>
    %18 = vector.extract_strided_slice %7 {offsets = [0, 128], sizes = [16, 128], strides = [1, 1]} : vector<16x256xf32> to vector<16x128xf32>
    %c80 = arith.constant 80 : index
    %c0_7 = arith.constant 0 : index
    %19 = vector.load %arg2[%c80, %c0_7] : memref<640x256xbf16, #tpu.memory_space<vmem>>, vector<128x256xbf16>
    %c208 = arith.constant 208 : index
    %c0_8 = arith.constant 0 : index
    %20 = vector.load %arg2[%c208, %c0_8] : memref<640x256xbf16, #tpu.memory_space<vmem>>, vector<1x256xbf16>
    %21 = arith.extf %20 : vector<1x256xbf16> to vector<1x256xf32>
    %cst_9 = arith.constant dense<0.000000e+00> : vector<16x256xf32>
    %22 = tpu.matmul %17, %19, %cst_9 {dimension_numbers = #tpu.dot_dimension_numbers<[1], [0], [0], [1], [0, 0, 1, 1], [], []>} : vector<16x128xbf16>, vector<128x256xbf16>, vector<16x256xf32> -> vector<16x256xf32>
    %23 = vector.broadcast %21 : vector<1x256xf32> to vector<16x256xf32>
    %24 = arith.addf %22, %23 : vector<16x256xf32>
    %25 = vector.extract_strided_slice %24 {offsets = [0, 128], sizes = [16, 128], strides = [1, 1]} : vector<16x256xf32> to vector<16x128xf32>
    %cst_10 = arith.constant 0.000000e+00 : f32
    %26 = vector.broadcast %cst_10 : f32 to vector<16x128xf32>
    %27 = arith.cmpf ogt, %25, %26 : vector<16x128xf32>
    %cst_11 = arith.constant 0.000000e+00 : f32
    %28 = vector.broadcast %cst_11 : f32 to vector<16x128xf32>
    %29 = arith.minimumf %25, %28 : vector<16x128xf32>
    %30 = math.exp %29 : vector<16x128xf32>
    %cst_12 = arith.constant 1.000000e+00 : f32
    %31 = vector.broadcast %cst_12 : f32 to vector<16x128xf32>
    %32 = arith.subf %30, %31 : vector<16x128xf32>
    %33 = arith.select %27, %25, %32 : vector<16x128xi1>, vector<16x128xf32>
    %34 = arith.truncf %33 : vector<16x128xf32> to vector<16x128xbf16>
    %35 = vector.extract_strided_slice %24 {offsets = [0, 0], sizes = [16, 128], strides = [1, 1]} : vector<16x256xf32> to vector<16x128xf32>
    %c224 = arith.constant 224 : index
    %c0_13 = arith.constant 0 : index
    %36 = vector.load %arg2[%c224, %c0_13] : memref<640x256xbf16, #tpu.memory_space<vmem>>, vector<128x128xbf16>
    %37 = arith.addf %18, %35 : vector<16x128xf32>
    %cst_14 = arith.constant dense<0.000000e+00> : vector<16x128xf32>
    %38 = tpu.matmul %34, %36, %cst_14 {dimension_numbers = #tpu.dot_dimension_numbers<[1], [0], [0], [1], [0, 0, 1, 1], [], []>} : vector<16x128xbf16>, vector<128x128xbf16>, vector<16x128xf32> -> vector<16x128xf32>
    %39 = arith.addf %37, %38 : vector<16x128xf32>
    %cst_15 = arith.constant 0.000000e+00 : f32
    %40 = vector.broadcast %cst_15 : f32 to vector<16x128xf32>
    %41 = arith.cmpf ogt, %39, %40 : vector<16x128xf32>
    %cst_16 = arith.constant 0.000000e+00 : f32
    %42 = vector.broadcast %cst_16 : f32 to vector<16x128xf32>
    %43 = arith.minimumf %39, %42 : vector<16x128xf32>
    %44 = math.exp %43 : vector<16x128xf32>
    %cst_17 = arith.constant 1.000000e+00 : f32
    %45 = vector.broadcast %cst_17 : f32 to vector<16x128xf32>
    %46 = arith.subf %44, %45 : vector<16x128xf32>
    %47 = arith.select %41, %39, %46 : vector<16x128xi1>, vector<16x128xf32>
    %48 = arith.truncf %47 : vector<16x128xf32> to vector<16x128xbf16>
    %c352 = arith.constant 352 : index
    %c0_18 = arith.constant 0 : index
    %49 = vector.load %arg2[%c352, %c0_18] : memref<640x256xbf16, #tpu.memory_space<vmem>>, vector<128x128xbf16>
    %c480 = arith.constant 480 : index
    %c0_19 = arith.constant 0 : index
    %50 = vector.load %arg2[%c480, %c0_19] : memref<640x256xbf16, #tpu.memory_space<vmem>>, vector<1x128xbf16>
    %51 = arith.extf %50 : vector<1x128xbf16> to vector<1x128xf32>
    %cst_20 = arith.constant dense<0.000000e+00> : vector<16x128xf32>
    %52 = tpu.matmul %48, %49, %cst_20 {dimension_numbers = #tpu.dot_dimension_numbers<[1], [0], [0], [1], [0, 0, 1, 1], [], []>} : vector<16x128xbf16>, vector<128x128xbf16>, vector<16x128xf32> -> vector<16x128xf32>
    %53 = vector.broadcast %51 : vector<1x128xf32> to vector<16x128xf32>
    %54 = arith.addf %52, %53 : vector<16x128xf32>
    %cst_21 = arith.constant 0.000000e+00 : f32
    %55 = vector.broadcast %cst_21 : f32 to vector<16x128xf32>
    %56 = arith.cmpf ogt, %54, %55 : vector<16x128xf32>
    %cst_22 = arith.constant 0.000000e+00 : f32
    %57 = vector.broadcast %cst_22 : f32 to vector<16x128xf32>
    %58 = arith.minimumf %54, %57 : vector<16x128xf32>
    %59 = math.exp %58 : vector<16x128xf32>
    %cst_23 = arith.constant 1.000000e+00 : f32
    %60 = vector.broadcast %cst_23 : f32 to vector<16x128xf32>
    %61 = arith.subf %59, %60 : vector<16x128xf32>
    %62 = arith.select %56, %54, %61 : vector<16x128xi1>, vector<16x128xf32>
    %63 = arith.truncf %62 : vector<16x128xf32> to vector<16x128xbf16>
    %c496 = arith.constant 496 : index
    %c0_24 = arith.constant 0 : index
    %64 = vector.load %arg2[%c496, %c0_24] : memref<640x256xbf16, #tpu.memory_space<vmem>>, vector<128x128xbf16>
    %c624 = arith.constant 624 : index
    %c0_25 = arith.constant 0 : index
    %65 = vector.load %arg2[%c624, %c0_25] : memref<640x256xbf16, #tpu.memory_space<vmem>>, vector<1x128xbf16>
    %66 = arith.extf %65 : vector<1x128xbf16> to vector<1x128xf32>
    %cst_26 = arith.constant dense<0.000000e+00> : vector<16x128xf32>
    %67 = tpu.matmul %63, %64, %cst_26 {dimension_numbers = #tpu.dot_dimension_numbers<[1], [0], [0], [1], [0, 0, 1, 1], [], []>} : vector<16x128xbf16>, vector<128x128xbf16>, vector<16x128xf32> -> vector<16x128xf32>
    %68 = vector.broadcast %66 : vector<1x128xf32> to vector<16x128xf32>
    %69 = arith.addf %67, %68 : vector<16x128xf32>
    %70 = vector.extract_strided_slice %69 {offsets = [0, 0], sizes = [16, 12], strides = [1, 1]} : vector<16x128xf32> to vector<16x12xf32>
    %c0_27 = arith.constant 0 : index
    %c0_28 = arith.constant 0 : index
    %71 = vector.load %arg3[%c0_27, %c0_28] : memref<16x12xf32, #tpu.memory_space<vmem>>, vector<16x12xf32>
    tpu.vector_store %arg3[%c0_27, %c0_28], %70 {strides = array<i32>} : memref<16x12xf32, #tpu.memory_space<vmem>>, vector<16x12xf32>,
    return
  }
  func.func @transform_0(%arg0: i32) -> (i32, i32) {
    %c0_i32 = arith.constant 0 : i32
    %c0_i32_0 = arith.constant 0 : i32
    return %arg0, %c0_i32 : i32, i32
  }
  func.func @transform_1(%arg0: i32) -> (i32, i32) {
    %c0_i32 = arith.constant 0 : i32
    %c0_i32_0 = arith.constant 0 : i32
    %c0_i32_1 = arith.constant 0 : i32
    return %c0_i32, %c0_i32_0 : i32, i32
  }
  func.func @transform_2(%arg0: i32) -> (i32, i32) {
    %c0_i32 = arith.constant 0 : i32
    %c0_i32_0 = arith.constant 0 : i32
    return %arg0, %c0_i32 : i32, i32
  }
}

</mosaic_0001>

<llo_original>
// kernel: tpu_custom_call.1
$region0: #{tpu_custom_call.1}
  #allocation0 [shape = 'u32[]', space=smem, size = 0x4, offset = 0x4, fixed_abs, tag = 'smem constant byte address 0x4 - core index']
  #allocation1 [shape = 'u32[144,128]{1,0:T(1,128)}', space=vmem, size = 0x12000, scoped, tag = 'internal scratch']
  %s0 = inlined_call_operand.hbm [shape: f32[16,64], index: 0, kind: input, shape index: {}]
  %s1 = inlined_call_operand.hbm [shape: bf16[640,256], index: 1, kind: input, shape index: {}]
  %s2 = inlined_call_operand.hbm [shape: f32[16,12], index: 2, kind: output, shape index: {}]
  %s3 = sld [smem:[#allocation0]]
  $region26: #{tpu_custom_call.1} parent=0
    _
  %s5 = ssub.s32 1, %s3
  %s6 = scalar_select 0, %s5, %s3
  $region1: #{tpu_custom_call.1} parent=0
    #allocation2 [shape = 'u8[8192]{0}', space=vmem, size = 0x2000, scoped, tag = 'input window, operand 0, single buffered']
    #allocation3 [shape = 's32[1]{0}', space=sflag, size = 0x4, scoped, tag = 'scoped memory for tpu_custom_call.1']
    #allocation4 [shape = 's32[1]{0}', space=sflag, size = 0x4, scoped, tag = 'scoped memory for tpu_custom_call.1']
    #allocation5 [shape = 'u8[327680]{0}', space=vmem, size = 0x50000, scoped, tag = 'input window, operand 1, single buffered']
    #allocation6 [shape = 's32[1]{0}', space=sflag, size = 0x4, scoped, tag = 'scoped memory for tpu_custom_call.1']
    #allocation7 [shape = 'u8[8192]{0}', space=vmem, size = 0x2000, scoped, tag = 'output window, operand 0, single buffered']
    %7 = vsyncpa [#allocation3], 0
    %8 = vsyncpa [#allocation6], 0
    %9 = vsyncpa [#allocation4], 0
    // Predicated region
    $region2: #{tpu_custom_call.1} parent=1 // pred_check
      _
    $region3: #{tpu_custom_call.1} parent=1 // pred_check_branch
      %11 = sbr.rel (0) target = $region5
    $region4: #{tpu_custom_call.1} parent=1 // pred_region
      %s13 = ssub.s32 256, 256
      %14 = vsyncadd [#allocation3], %s13
      %s15 = sshll.u32 [#allocation2], 4
      %s16 = int_to_ptr.vmem [resolvable:$true] %s15
      %21 = dma.hbm_to_vmem [thread:$0]  %s0, 256, %s16, [#allocation3], 128, 128, 8
    $region5: #{tpu_custom_call.1} parent=1 // pred_fallthru
      _
    // Predicated region
    $region6: #{tpu_custom_call.1} parent=1 // pred_check
      _
    $region7: #{tpu_custom_call.1} parent=1 // pred_check_branch
      %23 = sbr.rel (0) target = $region9
    $region8: #{tpu_custom_call.1} parent=1 // pred_region
      %s25 = ssub.s32 10240, 10240
      %26 = vsyncadd [#allocation6], %s25
      %s27 = sshll.u32 [#allocation5], 4
      %s28 = int_to_ptr.vmem [resolvable:$true] %s27
      %33 = dma.hbm_to_vmem [thread:$0]  %s1, 10240, %s28, [#allocation6], 128, 128, 8
    $region9: #{tpu_custom_call.1} parent=1 // pred_fallthru
      _
    // Predicated region
    $region10: #{tpu_custom_call.1} parent=1 // pred_check
      _
    $region11: #{tpu_custom_call.1} parent=1 // pred_check_branch
      %35 = sbr.rel (0) target = $region13
    $region12: #{tpu_custom_call.1} parent=1 // pred_region
      %36 = dma.done [#allocation3], 256
    $region13: #{tpu_custom_call.1} parent=1 // pred_fallthru
      _
    // Predicated region
    $region14: #{tpu_custom_call.1} parent=1 // pred_check
      _
    $region15: #{tpu_custom_call.1} parent=1 // pred_check_branch
      %38 = sbr.rel (0) target = $region17
    $region16: #{tpu_custom_call.1} parent=1 // pred_region
      %39 = dma.done [#allocation6], 10240
    $region17: #{tpu_custom_call.1} parent=1 // pred_fallthru
      _
    %v41 = vld [vmem:[#allocation2] sm:$0xff]
    %v42 = vld [vmem:[#allocation2 + $0x8] sm:$0xff]
    %v43 = vpack.c.bf16 %v42, %v41
    %v44 = vld [vmem:[#allocation5] sm:$0xff]
    %v45 = vld [vmem:[#allocation5 + $0x8] sm:$0xff]
    %v46 = vld [vmem:[#allocation5 + $0x10] sm:$0xff]
    %v47 = vld [vmem:[#allocation5 + $0x18] sm:$0xff]
    %v48 = vld [vmem:[#allocation5 + $0x20] sm:$0xff]
    %v49 = vld [vmem:[#allocation5 + $0x28] sm:$0xff]
    %v50 = vld [vmem:[#allocation5 + $0x30] sm:$0xff]
    %v51 = vld [vmem:[#allocation5 + $0x38] sm:$0xff]
    %v52 = vld [vmem:[#allocation5 + $0x40] sm:$0x11]
    %v53 = vunpack.c.l.bf16 %v52
    %v54 = vunpack.c.h.bf16 %v52
    %v55 = vlaneseq
    %v56 = vshrl.u32 %v55, 7
    %v57 = vsub.s32 0, %v56
    %v58 = vrot.slane %v53, %v57
    %v59 = vlaneseq
    %v60 = vshrl.u32 %v59, 7
    %v61 = vsub.s32 0, %v60
    %v62 = vrot.slane %v54, %v61
    %v71 = vunpack.c.l.b16 %v44
    %v72 = vunpack.c.h.b16 %v44
    %v73 = vunpack.c.l.b16 %v45
    %v74 = vunpack.c.h.b16 %v45
    %v75 = vunpack.c.l.b16 %v46
    %v76 = vunpack.c.h.b16 %v46
    %v77 = vunpack.c.l.b16 %v47
    %v78 = vunpack.c.h.b16 %v47
    %v79 = vunpack.c.l.b16 %v48
    %v80 = vunpack.c.h.b16 %v48
    %v81 = vunpack.c.l.b16 %v49
    %v82 = vunpack.c.h.b16 %v49
    %v83 = vunpack.c.l.b16 %v50
    %v84 = vunpack.c.h.b16 %v50
    %v85 = vunpack.c.l.b16 %v51
    %v86 = vunpack.c.h.b16 %v51
    %v87 = vpack.c.b16 %v73, %v71
    %v88 = vpack.c.b16 %v74, %v72
    %v89 = vpack.c.b16 %v77, %v75
    %v90 = vpack.c.b16 %v78, %v76
    %v91 = vpack.c.b16 %v81, %v79
    %v92 = vpack.c.b16 %v82, %v80
    %v93 = vpack.c.b16 %v85, %v83
    %v94 = vpack.c.b16 %v86, %v84
    %vm103 = vcmask 523264
    %v105 = vsel %vm103, %v43, 0
    %107 = vmatprep.subr.bf16.mxu0 0
    %108 = vmatpush1.bf16.msra.mxu0 0
    %109 = vmatprep.subr.bf16.mxu0 0
    %110 = vmatpush1.bf16.msra.mxu0 0
    %111 = vmatprep.subr.bf16.mxu0 0
    %112 = vmatpush1.bf16.msra.mxu0 0
    %113 = vmatprep.subr.bf16.mxu0 0
    %114 = vmatpush1.bf16.msra.mxu0 0
    %115 = vmatprep.subr.bf16.mxu0 %v94
    %116 = vmatpush1.bf16.msra.mxu0 %v93
    %117 = vmatprep.subr.bf16.mxu0 %v92
    %118 = vmatpush1.bf16.msra.mxu0 %v91
    %119 = vmatprep.subr.bf16.mxu0 %v90
    %120 = vmatpush1.bf16.msra.mxu0 %v89
    %121 = vmatprep.subr.bf16.mxu0 %v88
    %122 = vmatpush1.bf16.msra.mxu0 %v87
    %123 = vmatprep.subr.bf16.mxu0 0
    %124 = vmatpush2.bf16.msra.mxu0 0
    %125 = vmatprep.subr.bf16.mxu0 0
    %126 = vmatpush2.bf16.msra.mxu0 0
    %127 = vmatprep.subr.bf16.mxu0 0
    %128 = vmatpush2.bf16.msra.mxu0 0
    %129 = vmatprep.subr.bf16.mxu0 0
    %130 = vmatpush2.bf16.msra.mxu0 0
    %131 = vmatprep.subr.bf16.mxu0 0
    %132 = vmatpush2.bf16.msra.mxu0 0
    %133 = vmatprep.subr.bf16.mxu0 0
    %134 = vmatpush2.bf16.msra.mxu0 0
    %135 = vmatprep.subr.bf16.mxu0 0
    %136 = vmatpush2.bf16.msra.mxu0 0
    %137 = vmatprep.subr.bf16.mxu0 0
    %138 = vmatpush2.bf16.msra.mxu0 0
    %139 = vmatprep.mubr.bf16.mxu0 0
    %140 = vmatmul.mubr.bf16.gmra.mxu0 %v105
    %v141 = vpop.f32.mrf.mxu0
    %v142 = vadd.f32 %v58, %v141
    %v143 = vpop.f32.mrf.mxu0
    %v144 = vadd.f32 %v62, %v143
    %v145 = vpop.f32.mrf.mxu0
    %v146 = vadd.f32 %v58, %v145
    %v147 = vpop.f32.mrf.mxu0
    %v148 = vadd.f32 %v62, %v147
    %149 = vdwg.mxu0
    %vm150 = vcmp.gt.f32.partialorder %v142, 0.0
    %vm151 = vcmp.gt.f32.partialorder %v146, 0.0
    %v152 = vmin.f32 %v142, 0.0
    %v153 = vmin.f32 %v146, 0.0
    %v154 = vmul.f32 %v152, 1.442695
    %v155 = vpow.pop %v154
    %v156 = vmul.f32 %v153, 1.442695
    %v157 = vpow.pop %v156
    %v158 = vsub.f32 %v155, 1.0
    %v159 = vsub.f32 %v157, 1.0
    %v160 = vsel %vm150, %v142, %v158
    %v161 = vsel %vm151, %v146, %v159
    %v162 = vpack.c.bf16 %v161, %v160
    %v163 = vld [vmem:[#allocation5 + $0x50] sm:$0xff]
    %v164 = vld [vmem:[#allocation5 + $0x58] sm:$0xff]
    %v165 = vld [vmem:[#allocation5 + $0x60] sm:$0xff]
    %v166 = vld [vmem:[#allocation5 + $0x68] sm:$0xff]
    %v167 = vld [vmem:[#allocation5 + $0x70] sm:$0xff]
    %v168 = vld [vmem:[#allocation5 + $0x78] sm:$0xff]
    %v169 = vld [vmem:[#allocation5 + $0x80] sm:$0xff]
    %v170 = vld [vmem:[#allocation5 + $0x88] sm:$0xff]
    %v171 = vld [vmem:[#allocation5 + $0x90] sm:$0xff]
    %v172 = vld [vmem:[#allocation5 + $0x98] sm:$0xff]
    %v173 = vld [vmem:[#allocation5 + $0xa0] sm:$0xff]
    %v174 = vld [vmem:[#allocation5 + $0xa8] sm:$0xff]
    %v175 = vld [vmem:[#allocation5 + $0xb0] sm:$0xff]
    %v176 = vld [vmem:[#allocation5 + $0xb8] sm:$0xff]
    %v177 = vld [vmem:[#allocation5 + $0xc0] sm:$0xff]
    %v178 = vld [vmem:[#allocation5 + $0xc8] sm:$0xff]
    %v179 = vld [vmem:[#allocation5 + $0xd0] sm:$0x11]
    %v180 = vunpack.c.l.bf16 %v179
    %v181 = vunpack.c.h.bf16 %v179
    %v182 = vlaneseq
    %v183 = vshrl.u32 %v182, 7
    %v184 = vsub.s32 0, %v183
    %v185 = vrot.slane %v180, %v184
    %v186 = vlaneseq
    %v187 = vshrl.u32 %v186, 7
    %v188 = vsub.s32 0, %v187
    %v189 = vrot.slane %v181, %v188
    %v206 = vunpack.c.l.b16 %v163
    %v207 = vunpack.c.h.b16 %v163
    %v208 = vunpack.c.l.b16 %v164
    %v209 = vunpack.c.h.b16 %v164
    %v210 = vunpack.c.l.b16 %v165
    %v211 = vunpack.c.h.b16 %v165
    %v212 = vunpack.c.l.b16 %v166
    %v213 = vunpack.c.h.b16 %v166
    %v214 = vunpack.c.l.b16 %v167
    %v215 = vunpack.c.h.b16 %v167
    %v216 = vunpack.c.l.b16 %v168
    %v217 = vunpack.c.h.b16 %v168
    %v218 = vunpack.c.l.b16 %v169
    %v219 = vunpack.c.h.b16 %v169
    %v220 = vunpack.c.l.b16 %v170
    %v221 = vunpack.c.h.b16 %v170
    %v222 = vunpack.c.l.b16 %v171
    %v223 = vunpack.c.h.b16 %v171
    %v224 = vunpack.c.l.b16 %v172
    %v225 = vunpack.c.h.b16 %v172
    %v226 = vunpack.c.l.b16 %v173
    %v227 = vunpack.c.h.b16 %v173
    %v228 = vunpack.c.l.b16 %v174
    %v229 = vunpack.c.h.b16 %v174
    %v230 = vunpack.c.l.b16 %v175
    %v231 = vunpack.c.h.b16 %v175
    %v232 = vunpack.c.l.b16 %v176
    %v233 = vunpack.c.h.b16 %v176
    %v234 = vunpack.c.l.b16 %v177
    %v235 = vunpack.c.h.b16 %v177
    %v236 = vunpack.c.l.b16 %v178
    %v237 = vunpack.c.h.b16 %v178
    %v238 = vpack.c.b16 %v208, %v206
    %v239 = vpack.c.b16 %v209, %v207
    %v240 = vpack.c.b16 %v212, %v210
    %v241 = vpack.c.b16 %v213, %v211
    %v242 = vpack.c.b16 %v216, %v214
    %v243 = vpack.c.b16 %v217, %v215
    %v244 = vpack.c.b16 %v220, %v218
    %v245 = vpack.c.b16 %v221, %v219
    %v246 = vpack.c.b16 %v224, %v222
    %v247 = vpack.c.b16 %v225, %v223
    %v248 = vpack.c.b16 %v228, %v226
    %v249 = vpack.c.b16 %v229, %v227
    %v250 = vpack.c.b16 %v232, %v230
    %v251 = vpack.c.b16 %v233, %v231
    %v252 = vpack.c.b16 %v236, %v234
    %v253 = vpack.c.b16 %v237, %v235
    %270 = vmatprep.subr.bf16.mxu0 %v253
    %271 = vmatpush1.bf16.msra.mxu0 %v252
    %272 = vmatprep.subr.bf16.mxu0 %v251
    %273 = vmatpush1.bf16.msra.mxu0 %v250
    %274 = vmatprep.subr.bf16.mxu0 %v249
    %275 = vmatpush1.bf16.msra.mxu0 %v248
    %276 = vmatprep.subr.bf16.mxu0 %v247
    %277 = vmatpush1.bf16.msra.mxu0 %v246
    %278 = vmatprep.subr.bf16.mxu0 %v245
    %279 = vmatpush1.bf16.msra.mxu0 %v244
    %280 = vmatprep.subr.bf16.mxu0 %v243
    %281 = vmatpush1.bf16.msra.mxu0 %v242
    %282 = vmatprep.subr.bf16.mxu0 %v241
    %283 = vmatpush1.bf16.msra.mxu0 %v240
    %284 = vmatprep.subr.bf16.mxu0 %v239
    %285 = vmatpush1.bf16.msra.mxu0 %v238
    %286 = vmatprep.subr.bf16.mxu0 0
    %287 = vmatpush2.bf16.msra.mxu0 0
    %288 = vmatprep.subr.bf16.mxu0 0
    %289 = vmatpush2.bf16.msra.mxu0 0
    %290 = vmatprep.subr.bf16.mxu0 0
    %291 = vmatpush2.bf16.msra.mxu0 0
    %292 = vmatprep.subr.bf16.mxu0 0
    %293 = vmatpush2.bf16.msra.mxu0 0
    %294 = vmatprep.subr.bf16.mxu0 0
    %295 = vmatpush2.bf16.msra.mxu0 0
    %296 = vmatprep.subr.bf16.mxu0 0
    %297 = vmatpush2.bf16.msra.mxu0 0
    %298 = vmatprep.subr.bf16.mxu0 0
    %299 = vmatpush2.bf16.msra.mxu0 0
    %300 = vmatprep.subr.bf16.mxu0 0
    %301 = vmatpush2.bf16.msra.mxu0 0
    %302 = vmatprep.mubr.bf16.mxu0 0
    %303 = vmatmul.mubr.bf16.gmra.mxu0 %v162
    %v304 = vpop.f32.mrf.mxu0
    %v305 = vadd.f32 %v185, %v304
    %v306 = vpop.f32.mrf.mxu0
    %v307 = vadd.f32 %v189, %v306
    %v308 = vpop.f32.mrf.mxu0
    %v309 = vadd.f32 %v185, %v308
    %v310 = vpop.f32.mrf.mxu0
    %v311 = vadd.f32 %v189, %v310
    %312 = vdwg.mxu0
    %vm313 = vcmp.gt.f32.partialorder %v307, 0.0
    %vm314 = vcmp.gt.f32.partialorder %v311, 0.0
    %v315 = vmin.f32 %v307, 0.0
    %v316 = vmin.f32 %v311, 0.0
    %v317 = vmul.f32 %v315, 1.442695
    %v318 = vpow.pop %v317
    %v319 = vmul.f32 %v316, 1.442695
    %v320 = vpow.pop %v319
    %v321 = vsub.f32 %v318, 1.0
    %v322 = vsub.f32 %v320, 1.0
    %v323 = vsel %vm313, %v307, %v321
    %v324 = vsel %vm314, %v311, %v322
    %v325 = vpack.c.bf16 %v324, %v323
    %v326 = vld [vmem:[#allocation5 + $0xe0] sm:$0xf]
    %v327 = vld [vmem:[#allocation5 + $0xe8] sm:$0xf]
    %v328 = vld [vmem:[#allocation5 + $0xf0] sm:$0xf]
    %v329 = vld [vmem:[#allocation5 + $0xf8] sm:$0xf]
    %v330 = vld [vmem:[#allocation5 + $0x100] sm:$0xf]
    %v331 = vld [vmem:[#allocation5 + $0x108] sm:$0xf]
    %v332 = vld [vmem:[#allocation5 + $0x110] sm:$0xf]
    %v333 = vld [vmem:[#allocation5 + $0x118] sm:$0xf]
    %v334 = vld [vmem:[#allocation5 + $0x120] sm:$0xf]
    %v335 = vld [vmem:[#allocation5 + $0x128] sm:$0xf]
    %v336 = vld [vmem:[#allocation5 + $0x130] sm:$0xf]
    %v337 = vld [vmem:[#allocation5 + $0x138] sm:$0xf]
    %v338 = vld [vmem:[#allocation5 + $0x140] sm:$0xf]
    %v339 = vld [vmem:[#allocation5 + $0x148] sm:$0xf]
    %v340 = vld [vmem:[#allocation5 + $0x150] sm:$0xf]
    %v341 = vld [vmem:[#allocation5 + $0x158] sm:$0xf]
    %v342 = vadd.f32 %v144, %v305
    %v343 = vadd.f32 %v148, %v309
    %v360 = vunpack.c.l.b16 %v326
    %v361 = vunpack.c.l.b16 %v327
    %v362 = vunpack.c.l.b16 %v328
    %v363 = vunpack.c.l.b16 %v329
    %v364 = vunpack.c.l.b16 %v330
    %v365 = vunpack.c.l.b16 %v331
    %v366 = vunpack.c.l.b16 %v332
    %v367 = vunpack.c.l.b16 %v333
    %v368 = vunpack.c.l.b16 %v334
    %v369 = vunpack.c.l.b16 %v335
    %v370 = vunpack.c.l.b16 %v336
    %v371 = vunpack.c.l.b16 %v337
    %v372 = vunpack.c.l.b16 %v338
    %v373 = vunpack.c.l.b16 %v339
    %v374 = vunpack.c.l.b16 %v340
    %v375 = vunpack.c.l.b16 %v341
    %v376 = vpack.c.b16 %v361, %v360
    %v377 = vpack.c.b16 %v363, %v362
    %v378 = vpack.c.b16 %v365, %v364
    %v379 = vpack.c.b16 %v367, %v366
    %v380 = vpack.c.b16 %v369, %v368
    %v381 = vpack.c.b16 %v371, %v370
    %v382 = vpack.c.b16 %v373, %v372
    %v383 = vpack.c.b16 %v375, %v374
    %392 = vmatprep.subr.bf16.mxu0 0
    %393 = vmatpush1.bf16.msra.mxu0 %v383
    %394 = vmatprep.subr.bf16.mxu0 0
    %395 = vmatpush1.bf16.msra.mxu0 %v382
    %396 = vmatprep.subr.bf16.mxu0 0
    %397 = vmatpush1.bf16.msra.mxu0 %v381
    %398 = vmatprep.subr.bf16.mxu0 0
    %399 = vmatpush1.bf16.msra.mxu0 %v380
    %400 = vmatprep.subr.bf16.mxu0 0
    %401 = vmatpush1.bf16.msra.mxu0 %v379
    %402 = vmatprep.subr.bf16.mxu0 0
    %403 = vmatpush1.bf16.msra.mxu0 %v378
    %404 = vmatprep.subr.bf16.mxu0 0
    %405 = vmatpush1.bf16.msra.mxu0 %v377
    %406 = vmatprep.subr.bf16.mxu0 0
    %407 = vmatpush1.bf16.msra.mxu0 %v376
    %408 = vmatprep.subr.bf16.mxu0 0
    %409 = vmatpush2.bf16.msra.mxu0 0
    %410 = vmatprep.subr.bf16.mxu0 0
    %411 = vmatpush2.bf16.msra.mxu0 0
    %412 = vmatprep.subr.bf16.mxu0 0
    %413 = vmatpush2.bf16.msra.mxu0 0
    %414 = vmatprep.subr.bf16.mxu0 0
    %415 = vmatpush2.bf16.msra.mxu0 0
    %416 = vmatprep.subr.bf16.mxu0 0
    %417 = vmatpush2.bf16.msra.mxu0 0
    %418 = vmatprep.subr.bf16.mxu0 0
    %419 = vmatpush2.bf16.msra.mxu0 0
    %420 = vmatprep.subr.bf16.mxu0 0
    %421 = vmatpush2.bf16.msra.mxu0 0
    %422 = vmatprep.subr.bf16.mxu0 0
    %423 = vmatpush2.bf16.msra.mxu0 0
    %424 = vmatprep.mubr.bf16.mxu0 0
    %425 = vmatmul.mubr.bf16.gmra.mxu0 %v325
    %v426 = vpop.f32.mrf.mxu0
    %v427 = vadd.f32 0.0, %v426
    %v428 = vpop.f32.mrf.mxu0
    %v429 = vpop.f32.mrf.mxu0
    %v430 = vadd.f32 0.0, %v429
    %v431 = vpop.f32.mrf.mxu0
    %432 = vdwg.mxu0
    %v433 = vadd.f32 %v342, %v427
    %v434 = vadd.f32 %v343, %v430
    %vm435 = vcmp.gt.f32.partialorder %v433, 0.0
    %vm436 = vcmp.gt.f32.partialorder %v434, 0.0
    %v437 = vmin.f32 %v433, 0.0
    %v438 = vmin.f32 %v434, 0.0
    %v439 = vmul.f32 %v437, 1.442695
    %v440 = vpow.pop %v439
    %v441 = vmul.f32 %v438, 1.442695
    %v442 = vpow.pop %v441
    %v443 = vsub.f32 %v440, 1.0
    %v444 = vsub.f32 %v442, 1.0
    %v445 = vsel %vm435, %v433, %v443
    %v446 = vsel %vm436, %v434, %v444
    %v447 = vpack.c.bf16 %v446, %v445
    %v448 = vld [vmem:[#allocation5 + $0x160] sm:$0xf]
    %v449 = vld [vmem:[#allocation5 + $0x168] sm:$0xf]
    %v450 = vld [vmem:[#allocation5 + $0x170] sm:$0xf]
    %v451 = vld [vmem:[#allocation5 + $0x178] sm:$0xf]
    %v452 = vld [vmem:[#allocation5 + $0x180] sm:$0xf]
    %v453 = vld [vmem:[#allocation5 + $0x188] sm:$0xf]
    %v454 = vld [vmem:[#allocation5 + $0x190] sm:$0xf]
    %v455 = vld [vmem:[#allocation5 + $0x198] sm:$0xf]
    %v456 = vld [vmem:[#allocation5 + $0x1a0] sm:$0xf]
    %v457 = vld [vmem:[#allocation5 + $0x1a8] sm:$0xf]
    %v458 = vld [vmem:[#allocation5 + $0x1b0] sm:$0xf]
    %v459 = vld [vmem:[#allocation5 + $0x1b8] sm:$0xf]
    %v460 = vld [vmem:[#allocation5 + $0x1c0] sm:$0xf]
    %v461 = vld [vmem:[#allocation5 + $0x1c8] sm:$0xf]
    %v462 = vld [vmem:[#allocation5 + $0x1d0] sm:$0xf]
    %v463 = vld [vmem:[#allocation5 + $0x1d8] sm:$0xf]
    %v464 = vld [vmem:[#allocation5 + $0x1e0] sm:$0x1]
    %v465 = vunpack.c.l.bf16 %v464
    %v466 = vlaneseq
    %v467 = vshrl.u32 %v466, 7
    %v468 = vsub.s32 0, %v467
    %v469 = vrot.slane %v465, %v468
    %v486 = vunpack.c.l.b16 %v448
    %v487 = vunpack.c.l.b16 %v449
    %v488 = vunpack.c.l.b16 %v450
    %v489 = vunpack.c.l.b16 %v451
    %v490 = vunpack.c.l.b16 %v452
    %v491 = vunpack.c.l.b16 %v453
    %v492 = vunpack.c.l.b16 %v454
    %v493 = vunpack.c.l.b16 %v455
    %v494 = vunpack.c.l.b16 %v456
    %v495 = vunpack.c.l.b16 %v457
    %v496 = vunpack.c.l.b16 %v458
    %v497 = vunpack.c.l.b16 %v459
    %v498 = vunpack.c.l.b16 %v460
    %v499 = vunpack.c.l.b16 %v461
    %v500 = vunpack.c.l.b16 %v462
    %v501 = vunpack.c.l.b16 %v463
    %v502 = vpack.c.b16 %v487, %v486
    %v503 = vpack.c.b16 %v489, %v488
    %v504 = vpack.c.b16 %v491, %v490
    %v505 = vpack.c.b16 %v493, %v492
    %v506 = vpack.c.b16 %v495, %v494
    %v507 = vpack.c.b16 %v497, %v496
    %v508 = vpack.c.b16 %v499, %v498
    %v509 = vpack.c.b16 %v501, %v500
    %518 = vmatprep.subr.bf16.mxu0 0
    %519 = vmatpush1.bf16.msra.mxu0 %v509
    %520 = vmatprep.subr.bf16.mxu0 0
    %521 = vmatpush1.bf16.msra.mxu0 %v508
    %522 = vmatprep.subr.bf16.mxu0 0
    %523 = vmatpush1.bf16.msra.mxu0 %v507
    %524 = vmatprep.subr.bf16.mxu0 0
    %525 = vmatpush1.bf16.msra.mxu0 %v506
    %526 = vmatprep.subr.bf16.mxu0 0
    %527 = vmatpush1.bf16.msra.mxu0 %v505
    %528 = vmatprep.subr.bf16.mxu0 0
    %529 = vmatpush1.bf16.msra.mxu0 %v504
    %530 = vmatprep.subr.bf16.mxu0 0
    %531 = vmatpush1.bf16.msra.mxu0 %v503
    %532 = vmatprep.subr.bf16.mxu0 0
    %533 = vmatpush1.bf16.msra.mxu0 %v502
    %534 = vmatprep.subr.bf16.mxu0 0
    %535 = vmatpush2.bf16.msra.mxu0 0
    %536 = vmatprep.subr.bf16.mxu0 0
    %537 = vmatpush2.bf16.msra.mxu0 0
    %538 = vmatprep.subr.bf16.mxu0 0
    %539 = vmatpush2.bf16.msra.mxu0 0
    %540 = vmatprep.subr.bf16.mxu0 0
    %541 = vmatpush2.bf16.msra.mxu0 0
    %542 = vmatprep.subr.bf16.mxu0 0
    %543 = vmatpush2.bf16.msra.mxu0 0
    %544 = vmatprep.subr.bf16.mxu0 0
    %545 = vmatpush2.bf16.msra.mxu0 0
    %546 = vmatprep.subr.bf16.mxu0 0
    %547 = vmatpush2.bf16.msra.mxu0 0
    %548 = vmatprep.subr.bf16.mxu0 0
    %549 = vmatpush2.bf16.msra.mxu0 0
    %550 = vmatprep.mubr.bf16.mxu0 0
    %551 = vmatmul.mubr.bf16.gmra.mxu0 %v447
    %v552 = vpop.f32.mrf.mxu0
    %v553 = vadd.f32 %v469, %v552
    %v554 = vpop.f32.mrf.mxu0
    %v555 = vpop.f32.mrf.mxu0
    %v556 = vadd.f32 %v469, %v555
    %v557 = vpop.f32.mrf.mxu0
    %558 = vdwg.mxu0
    %vm559 = vcmp.gt.f32.partialorder %v553, 0.0
    %vm560 = vcmp.gt.f32.partialorder %v556, 0.0
    %v561 = vmin.f32 %v553, 0.0
    %v562 = vmin.f32 %v556, 0.0
    %v563 = vmul.f32 %v561, 1.442695
    %v564 = vpow.pop %v563
    %v565 = vmul.f32 %v562, 1.442695
    %v566 = vpow.pop %v565
    %v567 = vsub.f32 %v564, 1.0
    %v568 = vsub.f32 %v566, 1.0
    %v569 = vsel %vm559, %v553, %v567
    %v570 = vsel %vm560, %v556, %v568
    %v571 = vpack.c.bf16 %v570, %v569
    %v572 = vld [vmem:[#allocation5 + $0x1f0] sm:$0xf]
    %v573 = vld [vmem:[#allocation5 + $0x1f8] sm:$0xf]
    %v574 = vld [vmem:[#allocation5 + $0x200] sm:$0xf]
    %v575 = vld [vmem:[#allocation5 + $0x208] sm:$0xf]
    %v576 = vld [vmem:[#allocation5 + $0x210] sm:$0xf]
    %v577 = vld [vmem:[#allocation5 + $0x218] sm:$0xf]
    %v578 = vld [vmem:[#allocation5 + $0x220] sm:$0xf]
    %v579 = vld [vmem:[#allocation5 + $0x228] sm:$0xf]
    %v580 = vld [vmem:[#allocation5 + $0x230] sm:$0xf]
    %v581 = vld [vmem:[#allocation5 + $0x238] sm:$0xf]
    %v582 = vld [vmem:[#allocation5 + $0x240] sm:$0xf]
    %v583 = vld [vmem:[#allocation5 + $0x248] sm:$0xf]
    %v584 = vld [vmem:[#allocation5 + $0x250] sm:$0xf]
    %v585 = vld [vmem:[#allocation5 + $0x258] sm:$0xf]
    %v586 = vld [vmem:[#allocation5 + $0x260] sm:$0xf]
    %v587 = vld [vmem:[#allocation5 + $0x268] sm:$0xf]
    %v588 = vld [vmem:[#allocation5 + $0x270] sm:$0x1]
    %v589 = vunpack.c.l.bf16 %v588
    %v590 = vlaneseq
    %v591 = vshrl.u32 %v590, 7
    %v592 = vsub.s32 0, %v591
    %v593 = vrot.slane %v589, %v592
    %v610 = vunpack.c.l.b16 %v572
    %v611 = vunpack.c.l.b16 %v573
    %v612 = vunpack.c.l.b16 %v574
    %v613 = vunpack.c.l.b16 %v575
    %v614 = vunpack.c.l.b16 %v576
    %v615 = vunpack.c.l.b16 %v577
    %v616 = vunpack.c.l.b16 %v578
    %v617 = vunpack.c.l.b16 %v579
    %v618 = vunpack.c.l.b16 %v580
    %v619 = vunpack.c.l.b16 %v581
    %v620 = vunpack.c.l.b16 %v582
    %v621 = vunpack.c.l.b16 %v583
    %v622 = vunpack.c.l.b16 %v584
    %v623 = vunpack.c.l.b16 %v585
    %v624 = vunpack.c.l.b16 %v586
    %v625 = vunpack.c.l.b16 %v587
    %v626 = vpack.c.b16 %v611, %v610
    %v627 = vpack.c.b16 %v613, %v612
    %v628 = vpack.c.b16 %v615, %v614
    %v629 = vpack.c.b16 %v617, %v616
    %v630 = vpack.c.b16 %v619, %v618
    %v631 = vpack.c.b16 %v621, %v620
    %v632 = vpack.c.b16 %v623, %v622
    %v633 = vpack.c.b16 %v625, %v624
    %642 = vmatprep.subr.bf16.mxu0 0
    %643 = vmatpush1.bf16.msra.mxu0 %v633
    %644 = vmatprep.subr.bf16.mxu0 0
    %645 = vmatpush1.bf16.msra.mxu0 %v632
    %646 = vmatprep.subr.bf16.mxu0 0
    %647 = vmatpush1.bf16.msra.mxu0 %v631
    %648 = vmatprep.subr.bf16.mxu0 0
    %649 = vmatpush1.bf16.msra.mxu0 %v630
    %650 = vmatprep.subr.bf16.mxu0 0
    %651 = vmatpush1.bf16.msra.mxu0 %v629
    %652 = vmatprep.subr.bf16.mxu0 0
    %653 = vmatpush1.bf16.msra.mxu0 %v628
    %654 = vmatprep.subr.bf16.mxu0 0
    %655 = vmatpush1.bf16.msra.mxu0 %v627
    %656 = vmatprep.subr.bf16.mxu0 0
    %657 = vmatpush1.bf16.msra.mxu0 %v626
    %658 = vmatprep.subr.bf16.mxu0 0
    %659 = vmatpush2.bf16.msra.mxu0 0
    %660 = vmatprep.subr.bf16.mxu0 0
    %661 = vmatpush2.bf16.msra.mxu0 0
    %662 = vmatprep.subr.bf16.mxu0 0
    %663 = vmatpush2.bf16.msra.mxu0 0
    %664 = vmatprep.subr.bf16.mxu0 0
    %665 = vmatpush2.bf16.msra.mxu0 0
    %666 = vmatprep.subr.bf16.mxu0 0
    %667 = vmatpush2.bf16.msra.mxu0 0
    %668 = vmatprep.subr.bf16.mxu0 0
    %669 = vmatpush2.bf16.msra.mxu0 0
    %670 = vmatprep.subr.bf16.mxu0 0
    %671 = vmatpush2.bf16.msra.mxu0 0
    %672 = vmatprep.subr.bf16.mxu0 0
    %673 = vmatpush2.bf16.msra.mxu0 0
    %674 = vmatprep.mubr.bf16.mxu0 0
    %675 = vmatmul.mubr.bf16.gmra.mxu0 %v571
    %v676 = vpop.f32.mrf.mxu0
    %v677 = vadd.f32 %v593, %v676
    %v678 = vpop.f32.mrf.mxu0
    %v679 = vpop.f32.mrf.mxu0
    %v680 = vadd.f32 %v593, %v679
    %v681 = vpop.f32.mrf.mxu0
    %682 = vdwg.mxu0
    %vm683 = vcmask 97280
    %684 = vst.msk [vmem:[#allocation7] sm:$0xff] %vm683, %v677
    %685 = vst.msk [vmem:[#allocation7 + $0x8] sm:$0xff] %vm683, %v680
    // Predicated region
    $region18: #{tpu_custom_call.1} parent=1 // pred_check
      _
    $region19: #{tpu_custom_call.1} parent=1 // pred_check_branch
      %687 = sbr.rel (0) target = $region21
    $region20: #{tpu_custom_call.1} parent=1 // pred_region
      %s689 = ssub.s32 256, 256
      %690 = vsyncadd [#allocation4], %s689
      %s691 = sshll.u32 [#allocation7], 4
      %s692 = int_to_ptr.vmem [resolvable:$true] %s691
      %697 = dma.vmem_to_hbm [thread:$0]  %s692, 256, %s2, [#allocation4], 128, 128, 8
    $region21: #{tpu_custom_call.1} parent=1 // pred_fallthru
      _
    // Predicated region
    $region22: #{tpu_custom_call.1} parent=1 // pred_check
      _
    $region23: #{tpu_custom_call.1} parent=1 // pred_check_branch
      %699 = sbr.rel (0) target = $region25
    $region24: #{tpu_custom_call.1} parent=1 // pred_region
      %700 = dma.done [#allocation4], 256
    $region25: #{tpu_custom_call.1} parent=1 // pred_fallthru
      _
    %701 = vsyncpa [#allocation3], 1
    %702 = vsyncpa [#allocation6], 1
    %703 = vsyncpa [#allocation4], 1

</llo_original>
